<compile_context>
chip_gen: v7x
topology: tpu7x:2x2x1
jax: 0.10.0
libtpu: 0.0.40
codegen_flags: <defaults>
</compile_context>

<pallas_src>
import functools

import jax
import jax.numpy as jnp
from jax.experimental import pallas as pl
from jax.experimental.pallas import tpu as pltpu

_LANE = 128
_SUBLANE = 8
_NEG_BIG = -1e30  # bias on padded vocab columns -> exp() underflows to 0


def _round_up(x, m):
    return ((x + m - 1) // m) * m


# --------------------------------------------------------------------------
# Kernel: one (batch-tile, mixture) grid step.
# --------------------------------------------------------------------------
def _mixture_softmax_kernel(x_ref, w_ref, b_ref, nw_ref, o_ref, acc_ref, *,
                            approx_recip):
    k = pl.program_id(1)

    # MXU matmul in the operands' native dtype (bf16 by default), f32 accumulate.
    logits = jnp.dot(x_ref[...], w_ref[...],
                     preferred_element_type=jnp.float32)          # [TB, Vp] f32
    logits = logits + b_ref[...]                                  # pad cols -> -1e30

    logits = logits - jnp.max(logits, axis=-1, keepdims=True)
    p = jnp.exp(logits)                                           # pad cols -> 0
    denom = jnp.sum(p, axis=-1, keepdims=True)                    # [TB, 1]
    if approx_recip:
        inv = pl.reciprocal(denom, approx=True)                   # EUP slot
    else:
        inv = 1.0 / denom
    term = p * (nw_ref[k] * inv)                                  # scalar*[TB,1], one tile mul

    @pl.when(k == 0)
    def _init():
        acc_ref[...] = term

    @pl.when(k != 0)
    def _accum():
        acc_ref[...] = acc_ref[...] + term

    @pl.when(k == pl.num_programs(1) - 1)
    def _finish():
        o_ref[...] = jnp.log(acc_ref[...])                        # pad cols -> -inf (sliced off)


# --------------------------------------------------------------------------
# One-time parameter preparation (hoisted out of the per-call hot path).
# --------------------------------------------------------------------------
def prepare_mixture_softmax_params(weight, bias, unnorm_mix_weights, *,
                                   num_mixtures, output_size,
                                   mxu_dtype=jnp.bfloat16):
    """weight: [K*V, D] (nn.Linear layout), bias: [K*V], unnorm_mix_weights: [K]."""
    K, V = num_mixtures, output_size
    D = weight.shape[1]
    assert weight.shape == (K * V, D)

    # 256-lane alignment fills v6e/v7x 2x256 MXU passes; keep 128 for small V so
    # pad-lane exp/max/sum (EUP/XLU) work stays bounded.
    align = 256 if V > _LANE else _LANE
    Vp = _round_up(V, align)

    w_t = jnp.asarray(weight).T.reshape(D, K, V)                              # [D, K, V]
    w_pad = jnp.pad(w_t, ((0, 0), (0, 0), (0, Vp - V)))
    w_pad = w_pad.reshape(D, K * Vp).astype(mxu_dtype)                        # [D, K*Vp]

    b_pad = jnp.pad(jnp.asarray(bias, jnp.float32).reshape(K, V),
                    ((0, 0), (0, Vp - V)),
                    constant_values=jnp.float32(_NEG_BIG)).reshape(1, K * Vp)  # [1, K*Vp]

    nw = jax.nn.softmax(jnp.asarray(unnorm_mix_weights, jnp.float32))          # [K]

    return dict(weight_padded=w_pad, bias_padded=b_pad, norm_weights=nw,
                num_mixtures=K, output_size=V, input_size=D,
                v_padded=Vp, mxu_dtype=mxu_dtype)


# --------------------------------------------------------------------------
# VMEM budgeting.
# --------------------------------------------------------------------------
def _vmem_bytes_estimate(TB, D, Vp, in_isz, w_isz):
    est = 2 * TB * D * in_isz          # x tile (double-buffered)
    est += 2 * D * Vp * w_isz          # per-mixture weight slice (streamed, 2 bufs)
    est += 2 * Vp * 4                  # per-mixture bias slice
    est += 2 * TB * Vp * 4             # output tile
    est += TB * Vp * 4                 # accumulator scratch
    est += 3 * TB * Vp * 4             # in-kernel f32 temporaries (logits / p / term)
    est += 2 << 20                     # headroom
    return est


def _vmem_capacity_bytes():
    try:
        return int(pltpu.get_tpu_info().vmem_capacity_bytes)
    except Exception:
        return 64 << 20                # conservative (v7x per-TC), valid on all gens


# --------------------------------------------------------------------------
# Forward wrapper.
# --------------------------------------------------------------------------
def mixture_softmax_forward(x, params, *, block_b=256, exact_reciprocal=False):
    """x: [B, D] -> log mixed probs [B, V] (f32)."""
    B, D = x.shape
    K = params["num_mixtures"]
    V = params["output_size"]
    Vp = params["v_padded"]
    assert D == params["input_size"]
    w_pad = params["weight_padded"]
    b_pad = params["bias_padded"]
    nw = params["norm_weights"]
    mxu_dtype = params["mxu_dtype"]

    x_in = x.astype(mxu_dtype)

    # Largest batch tile whose (pipelined tiles + scratch + temporaries) fits
    # 85% of the per-core VMEM capacity.  On v7x, callers with small B can pass
    # block_b=128 so the "parallel" batch axis has >= 2 steps for both TCs.
    cap = int(0.85 * _vmem_capacity_bytes())
    in_isz = jnp.dtype(mxu_dtype).itemsize
    w_isz = jnp.dtype(w_pad.dtype).itemsize
    TB = min(block_b, _round_up(B, _SUBLANE))
    TB = _round_up(TB, _SUBLANE)
    while TB > _SUBLANE and _vmem_bytes_estimate(TB, D, Vp, in_isz, w_isz) > cap:
        TB = _round_up(max(_SUBLANE, TB // 2), _SUBLANE)

    B_pad = _round_up(B, TB)
    if B_pad != B:
        x_in = jnp.pad(x_in, ((0, B_pad - B), (0, 0)))

    est = _vmem_bytes_estimate(TB, D, Vp, in_isz, w_isz)
    vmem_limit = None if est < (16 << 20) else int(min(est, cap))

    kernel = functools.partial(_mixture_softmax_kernel,
                               approx_recip=not exact_reciprocal)

    out = pl.pallas_call(
        kernel,
        out_shape=jax.ShapeDtypeStruct((B_pad, Vp), jnp.float32),
        grid=(B_pad // TB, K),
        in_specs=[
            pl.BlockSpec((TB, D), lambda i, k: (i, 0)),          # x: one DMA per batch tile
            pl.BlockSpec((D, Vp), lambda i, k: (0, k)),          # weight: streamed per mixture
            pl.BlockSpec((1, Vp), lambda i, k: (0, k)),          # bias: streamed per mixture
            pl.BlockSpec(memory_space=pltpu.MemorySpace.SMEM),   # normalized mixture weights
        ],
        out_specs=pl.BlockSpec((TB, Vp), lambda i, k: (i, 0)),
        scratch_shapes=[pltpu.VMEM((TB, Vp), jnp.float32)],
        compiler_params=pltpu.CompilerParams(
            dimension_semantics=("parallel", "arbitrary"),
            vmem_limit_bytes=vmem_limit,
        ),
    )(x_in, w_pad, b_pad, nw)

    return out[:B, :V]


# --------------------------------------------------------------------------
# Pure-JAX reference mirroring the PyTorch forward.
# --------------------------------------------------------------------------
def mixture_softmax_ref(x, weight, bias, unnorm_mix_weights, *,
                        num_mixtures, output_size, mxu_dtype=None):
    B = x.shape[0]
    weight_t = weight.T
    if mxu_dtype is not None:
        x = x.astype(mxu_dtype)
        weight_t = weight_t.astype(mxu_dtype)
    logits = jnp.dot(x, weight_t, preferred_element_type=jnp.float32) \
        + bias.astype(jnp.float32)
    logits = logits.reshape(B, num_mixtures, output_size)
    probs = jax.nn.softmax(logits, axis=-1)
    w = jax.nn.softmax(unnorm_mix_weights.astype(jnp.float32), axis=-1)
    mixed = jnp.einsum('k,bkj->bj', w, probs)
    return jnp.log(mixed)


if __name__ == "__main__":
    # Small shapes consistent with the module: batch=8, input_size=32,
    # output_size=16, num_mixtures=3.
    B, D, V, K = 8, 32, 16, 3

    key = jax.random.PRNGKey(0)
    k_x, k_w, k_b, k_m = jax.random.split(key, 4)

    x = jax.random.normal(k_x, (B, D), dtype=jnp.float32)
    # nn.Linear(input_size, output_size*num_mixtures): weight [K*V, D], bias [K*V].
    weight = jax.random.normal(k_w, (K * V, D), dtype=jnp.float32) * (1.0 / jnp.sqrt(D))
    bias = jax.random.normal(k_b, (K * V,), dtype=jnp.float32) * 0.01
    unnorm_mix_weights = jax.random.normal(k_m, (K,), dtype=jnp.float32)

    # --- f32 operand path, exact reciprocal: tight check vs JAX reference -----
    params_f32 = prepare_mixture_softmax_params(
        weight, bias, unnorm_mix_weights,
        num_mixtures=K, output_size=V, mxu_dtype=jnp.float32)
    out_f32 = mixture_softmax_forward(x, params_f32, exact_reciprocal=True)
    out_f32 = jax.block_until_ready(out_f32)
    ref_f32 = mixture_softmax_ref(x, weight, bias, unnorm_mix_weights,
                                  num_mixtures=K, output_size=V)
    assert out_f32.shape == (B, V)
    assert jnp.allclose(out_f32, ref_f32, atol=1e-4, rtol=1e-4), \
        "f32 path mismatch vs JAX reference"

    # --- default bf16 MXU-operand path (approx reciprocal), bf16-consistent ref
    params_bf16 = prepare_mixture_softmax_params(
        weight, bias, unnorm_mix_weights,
        num_mixtures=K, output_size=V)          # mxu_dtype defaults to bfloat16
    out_bf16 = mixture_softmax_forward(x, params_bf16)
    out_bf16 = jax.block_until_ready(out_bf16)
    ref_bf16 = mixture_softmax_ref(x, weight, bias, unnorm_mix_weights,
                                   num_mixtures=K, output_size=V,
                                   mxu_dtype=jnp.bfloat16)
    assert out_bf16.shape == (B, V)
    assert jnp.allclose(out_bf16, ref_bf16, atol=5e-3, rtol=5e-3), \
        "bf16 path mismatch vs JAX reference"

    print("KERNEL_OK")
</pallas_src>

<mosaic_0001>
module attributes {stable_mosaic.version = 11 : i64} {
  func.func @_mixture_softmax_kernel(%arg0: i32, %arg1: i32, %arg2: memref<8x32xf32, #tpu.memory_space<vmem>>, %arg3: memref<32x128xf32, #tpu.memory_space<vmem>>, %arg4: memref<1x128xf32, #tpu.memory_space<vmem>>, %arg5: memref<3xf32, #tpu.memory_space<smem>>, %arg6: memref<8x128xf32, #tpu.memory_space<vmem>>, %arg7: memref<8x128xf32, #tpu.memory_space<vmem>>) attributes {dimension_semantics = [#tpu.dimension_semantics<parallel>, #tpu.dimension_semantics<arbitrary>], iteration_bounds = array<i64: 1, 3>, scalar_prefetch = 0 : i64, scratch_operands = 1 : i64, tpu.core_type = #tpu.core_type<tc>, window_params = [{transform_indices = @transform_0, window_bounds = array<i64: 8, 32>}, {transform_indices = @transform_1, window_bounds = array<i64: 32, 128>}, {transform_indices = @transform_2, window_bounds = array<i64: 1, 128>}, {transform_indices = @transform_3, window_bounds = array<i64: 3>}, {transform_indices = @transform_4, window_bounds = array<i64: 8, 128>}]} {
    %c0 = arith.constant 0 : index
    %c0_0 = arith.constant 0 : index
    %0 = vector.load %arg2[%c0, %c0_0] : memref<8x32xf32, #tpu.memory_space<vmem>>, vector<8x32xf32>
    %c0_1 = arith.constant 0 : index
    %c0_2 = arith.constant 0 : index
    %1 = vector.load %arg3[%c0_1, %c0_2] : memref<32x128xf32, #tpu.memory_space<vmem>>, vector<32x128xf32>
    %cst = arith.constant dense<0.000000e+00> : vector<8x128xf32>
    %2 = tpu.matmul %0, %1, %cst {dimension_numbers = #tpu.dot_dimension_numbers<[1], [0], [0], [1], [0, 0, 1, 1], [], []>} : vector<8x32xf32>, vector<32x128xf32>, vector<8x128xf32> -> vector<8x128xf32>
    %c0_3 = arith.constant 0 : index
    %c0_4 = arith.constant 0 : index
    %3 = vector.load %arg4[%c0_3, %c0_4] : memref<1x128xf32, #tpu.memory_space<vmem>>, vector<1x128xf32>
    %4 = vector.broadcast %3 : vector<1x128xf32> to vector<8x128xf32>
    %5 = arith.addf %2, %4 : vector<8x128xf32>
    %cst_5 = arith.constant dense<0xFF800000> : vector<8xf32>
    %6 = vector.multi_reduction <maximumf>, %5, %cst_5 [1] : vector<8x128xf32> to vector<8xf32>
    %7 = vector.shape_cast %6 : vector<8xf32> to vector<8x1xf32>
    %8 = vector.broadcast %7 : vector<8x1xf32> to vector<8x128xf32>
    %9 = arith.subf %5, %8 : vector<8x128xf32>
    %10 = math.exp %9 : vector<8x128xf32>
    %cst_6 = arith.constant dense<0.000000e+00> : vector<8xf32>
    %11 = vector.multi_reduction <add>, %10, %cst_6 [1] : vector<8x128xf32> to vector<8xf32>
    %12 = vector.shape_cast %11 : vector<8xf32> to vector<8x1xf32>
    %cst_7 = arith.constant 1.000000e+00 : f32
    %13 = vector.broadcast %cst_7 : f32 to vector<8x1xf32>
    %14 = arith.divf %13, %12 : vector<8x1xf32>
    %15 = arith.index_cast %arg1 : i32 to index
    %16 = memref.load %arg5[%15] : memref<3xf32, #tpu.memory_space<smem>>
    %17 = vector.broadcast %16 : f32 to vector<8x1xf32>
    %18 = arith.mulf %17, %14 : vector<8x1xf32>
    %19 = vector.broadcast %18 : vector<8x1xf32> to vector<8x128xf32>
    %20 = arith.mulf %10, %19 : vector<8x128xf32>
    %c0_i32 = arith.constant 0 : i32
    %21 = arith.cmpi eq, %arg1, %c0_i32 : i32
    %22 = arith.extui %21 : i1 to i32
    %c0_i32_8 = arith.constant 0 : i32
    %23 = arith.cmpi ne, %22, %c0_i32_8 : i32
    scf.if %23 {
      %c0_12 = arith.constant 0 : index
      %c0_13 = arith.constant 0 : index
      %30 = vector.load %arg7[%c0_12, %c0_13] : memref<8x128xf32, #tpu.memory_space<vmem>>, vector<8x128xf32>
      tpu.vector_store %arg7[%c0_12, %c0_13], %20 {strides = array<i32>} : memref<8x128xf32, #tpu.memory_space<vmem>>, vector<8x128xf32>,
    } else {
    }
    %c0_i32_9 = arith.constant 0 : i32
    %24 = arith.cmpi ne, %arg1, %c0_i32_9 : i32
    %25 = arith.extui %24 : i1 to i32
    %c0_i32_10 = arith.constant 0 : i32
    %26 = arith.cmpi ne, %25, %c0_i32_10 : i32
    scf.if %26 {
      %c0_12 = arith.constant 0 : index
      %c0_13 = arith.constant 0 : index
      %30 = vector.load %arg7[%c0_12, %c0_13] : memref<8x128xf32, #tpu.memory_space<vmem>>, vector<8x128xf32>
      %31 = arith.addf %30, %20 : vector<8x128xf32>
      %c0_14 = arith.constant 0 : index
      %c0_15 = arith.constant 0 : index
      %32 = vector.load %arg7[%c0_14, %c0_15] : memref<8x128xf32, #tpu.memory_space<vmem>>, vector<8x128xf32>
      tpu.vector_store %arg7[%c0_14, %c0_15], %31 {strides = array<i32>} : memref<8x128xf32, #tpu.memory_space<vmem>>, vector<8x128xf32>,
    } else {
    }
    %c2_i32 = arith.constant 2 : i32
    %27 = arith.cmpi eq, %arg1, %c2_i32 : i32
    %28 = arith.extui %27 : i1 to i32
    %c0_i32_11 = arith.constant 0 : i32
    %29 = arith.cmpi ne, %28, %c0_i32_11 : i32
    scf.if %29 {
      %c0_12 = arith.constant 0 : index
      %c0_13 = arith.constant 0 : index
      %30 = vector.load %arg7[%c0_12, %c0_13] : memref<8x128xf32, #tpu.memory_space<vmem>>, vector<8x128xf32>
      %31 = math.log %30 : vector<8x128xf32>
      %c0_14 = arith.constant 0 : index
      %c0_15 = arith.constant 0 : index
      %32 = vector.load %arg6[%c0_14, %c0_15] : memref<8x128xf32, #tpu.memory_space<vmem>>, vector<8x128xf32>
      tpu.vector_store %arg6[%c0_14, %c0_15], %31 {strides = array<i32>} : memref<8x128xf32, #tpu.memory_space<vmem>>, vector<8x128xf32>,
    } else {
    }
    return
  }
  func.func @transform_0(%arg0: i32, %arg1: i32) -> (i32, i32) {
    %c0_i32 = arith.constant 0 : i32
    %c0_i32_0 = arith.constant 0 : i32
    return %arg0, %c0_i32 : i32, i32
  }
  func.func @transform_1(%arg0: i32, %arg1: i32) -> (i32, i32) {
    %c0_i32 = arith.constant 0 : i32
    %c0_i32_0 = arith.constant 0 : i32
    return %c0_i32, %arg1 : i32, i32
  }
  func.func @transform_2(%arg0: i32, %arg1: i32) -> (i32, i32) {
    %c0_i32 = arith.constant 0 : i32
    %c0_i32_0 = arith.constant 0 : i32
    return %c0_i32, %arg1 : i32, i32
  }
  func.func @transform_3(%arg0: i32, %arg1: i32) -> i32 {
    %c0_i32 = arith.constant 0 : i32
    %c0_i32_0 = arith.constant 0 : i32
    return %c0_i32 : i32
  }
  func.func @transform_4(%arg0: i32, %arg1: i32) -> (i32, i32) {
    %c0_i32 = arith.constant 0 : i32
    %c0_i32_0 = arith.constant 0 : i32
    return %arg0, %c0_i32 : i32, i32
  }
}

</mosaic_0001>

<llo_original>
// kernel: tpu_custom_call.1
$region0: #{tpu_custom_call.1}
  #allocation0 [shape = 'u32[]', space=smem, size = 0x4, offset = 0x4, fixed_abs, tag = 'smem constant byte address 0x4 - core index']
  #allocation1 [shape = 'u32[144,128]{1,0:T(1,128)}', space=vmem, size = 0x12000, scoped, tag = 'internal scratch']
  #allocation2 [shape = 'f32[8,128]{1,0:T(8,128)}', space=vmem, size = 0x1000, scoped, tag = 'scratch operand']
  %s0 = inlined_call_operand.hbm [shape: f32[8,32], index: 0, kind: input, shape index: {}]
  %s1 = inlined_call_operand.hbm [shape: f32[32,384], index: 1, kind: input, shape index: {}]
  %s2 = inlined_call_operand.vmem [shape: f32[1,384], index: 2, kind: input, shape index: {}]
  %s3 = inlined_call_operand.vmem [shape: f32[3], index: 3, kind: input, shape index: {}]
  %s4 = inlined_call_operand.hbm [shape: f32[8,128], index: 4, kind: output, shape index: {}]
  %s5 = sld [smem:[#allocation0]]
  $region73: #{tpu_custom_call.1} parent=0
    _
  %s7 = ssub.s32 1, %s5
  %s8 = scalar_select 0, %s7, %s5
  $region1: #{tpu_custom_call.1} parent=0
    #allocation3 [shape = 'u8[4096]{0}', space=vmem, size = 0x1000, scoped, tag = 'input window, operand 0, single buffered']
    #allocation4 [shape = 's32[2]{0}', space=sflag, size = 0x8, scoped, tag = 'scoped memory for tpu_custom_call.1']
    #allocation5 [shape = 's32[2]{0}', space=sflag, size = 0x8, scoped, tag = 'scoped memory for tpu_custom_call.1']
    #allocation6 [shape = 's32[2]{0}', space=sflag, size = 0x8, scoped, tag = 'scoped memory for tpu_custom_call.1']
    #allocation7 [shape = 'u8[32768]{0}', space=vmem, size = 0x8000, scoped, tag = 'input window, operand 1']
    #allocation8 [shape = 's32[2]{0}', space=sflag, size = 0x8, scoped, tag = 'scoped memory for tpu_custom_call.1']
    #allocation9 [shape = 'u8[512]{0}', space=smem, size = 0x200, scoped, tag = 'input window, operand 3, single buffered']
    #allocation10 [shape = 'u8[4096]{0}', space=vmem, size = 0x1000, scoped, tag = 'output window, operand 0, single buffered']
    %9 = vsyncpa [#allocation4], 0
    %10 = vsyncpa [#allocation8], 0
    %s11 = scalar_lea.sflag [#allocation8], 1
    %12 = vsyncpa %s11, 0
    %13 = vsyncpa [#allocation6], 0
    %14 = vsyncpa [#allocation5], 0
    loop: start=0, step=1, limit=5
    $region2: #{tpu_custom_call.1} parent=1 // loop_pre_header
      _
    $region3: #{tpu_custom_call.1} parent=1 // loop_header
      %s16 = sphi 0, %s20
      %p17 = scmp.ge.s32.totalorder %s16, 5
      %s23 = sphi 0, %s35
      %s24 = sphi 0, %s31
      %s25 = sphi 0, %s23
      %s26 = sphi 0, %s24
      %s27 = sphi 0, %s25
      %s28 = sphi 0, %s26
      %s38 = sphi 0, %s40
      %s41 = sphi 0, %s38
      %s42 = sphi 0, %s41
      %s58 = sphi 0, %s42
      %s64 = sphi 0, %s66
      %s67 = sphi 0, %s64
      %s68 = sphi 0, %s67
      %s84 = sphi 0, %s68
      %s90 = sphi 0, %s92
      %s93 = sphi 0, %s90
      %s94 = sphi 0, %s93
      %s110 = sphi 0, %s94
      %s114 = sphi 0, %s114
      %s116 = sphi 0, %s114
      %s117 = sphi 0, %s116
      %s131 = sphi 0, %s117
      %s137 = sphi 0, %s139
      %s140 = sphi 0, %s137
      %s141 = sphi 0, %s140
      %s157 = sphi 0, %s141
    $region4: #{tpu_custom_call.1} parent=1 // loop_header_branch
      %19 = sbr.rel (%p17) target = $region8
    $region5: #{tpu_custom_call.1} parent=1 // loop_body
      %s21 = ssub.s32 %s16, 1
      %s22 = ssub.s32 %s16, 2
      %s29 = sadd.s32 1, %s24
      %p30 = scmp.ge.s32.totalorder %s29, 3
      %s31 = scalar_select %p30, 0, %s29
      %s32 = sadd.s32 1, %s23
      %s33 = scalar_select %p30, %s32, %s23
      %p34 = scmp.ge.s32.totalorder %s33, 1
      %s35 = scalar_select %p34, 0, %s33
      %s36 = ssub.s32 %s23, %s35
      %p37 = scmp.eq.s32.totalorder %s36, 0
      %s39 = sadd.s32 %s38, 1
      %s40 = scalar_select %p37, %s38, %s39
      %p43 = pneg %p37
      %p44 = scmp.eq.s32.totalorder %s16, 2
      %p45 = por %p43, %p44
      %p46 = scmp.ne.s32.totalorder %s38, %s41
      %p47 = scmp.eq.s32.totalorder %s16, 0
      %p48 = por %p46, %p47
      %p49 = scmp.ne.s32.totalorder %s38, %s41
      %p50 = scmp.eq.s32.totalorder %s21, 2
      %p51 = por %p49, %p50
      %p52 = scmp.ne.s32.totalorder %s41, %s42
      %p53 = scmp.eq.s32.totalorder %s21, 0
      %p54 = por %p52, %p53
      %p55 = scmp.ne.s32.totalorder %s41, %s42
      %p56 = scmp.eq.s32.totalorder %s22, 2
      %p57 = por %p55, %p56
      %p59 = scmp.ne.s32.totalorder %s42, %s58
      %p60 = scmp.eq.s32.totalorder %s22, 0
      %p61 = por %p59, %p60
      %s62 = ssub.s32 %s24, %s31
      %p63 = scmp.eq.s32.totalorder %s62, 0
      %s65 = sadd.s32 %s64, 1
      %s66 = scalar_select %p63, %s64, %s65
      %p69 = pneg %p63
      %p70 = scmp.eq.s32.totalorder %s16, 2
      %p71 = por %p69, %p70
      %p72 = scmp.ne.s32.totalorder %s64, %s67
      %p73 = scmp.eq.s32.totalorder %s16, 0
      %p74 = por %p72, %p73
      %p75 = scmp.ne.s32.totalorder %s64, %s67
      %p76 = scmp.eq.s32.totalorder %s21, 2
      %p77 = por %p75, %p76
      %p78 = scmp.ne.s32.totalorder %s67, %s68
      %p79 = scmp.eq.s32.totalorder %s21, 0
      %p80 = por %p78, %p79
      %p81 = scmp.ne.s32.totalorder %s67, %s68
      %p82 = scmp.eq.s32.totalorder %s22, 2
      %p83 = por %p81, %p82
      %p85 = scmp.ne.s32.totalorder %s68, %s84
      %p86 = scmp.eq.s32.totalorder %s22, 0
      %p87 = por %p85, %p86
      %s88 = ssub.s32 %s24, %s31
      %p89 = scmp.eq.s32.totalorder %s88, 0
      %s91 = sadd.s32 %s90, 1
      %s92 = scalar_select %p89, %s90, %s91
      %p95 = pneg %p89
      %p96 = scmp.eq.s32.totalorder %s16, 2
      %p97 = por %p95, %p96
      %p98 = scmp.ne.s32.totalorder %s90, %s93
      %p99 = scmp.eq.s32.totalorder %s16, 0
      %p100 = por %p98, %p99
      %p101 = scmp.ne.s32.totalorder %s90, %s93
      %p102 = scmp.eq.s32.totalorder %s21, 2
      %p103 = por %p101, %p102
      %p104 = scmp.ne.s32.totalorder %s93, %s94
      %p105 = scmp.eq.s32.totalorder %s21, 0
      %p106 = por %p104, %p105
      %p107 = scmp.ne.s32.totalorder %s93, %s94
      %p108 = scmp.eq.s32.totalorder %s22, 2
      %p109 = por %p107, %p108
      %p111 = scmp.ne.s32.totalorder %s94, %s110
      %p112 = scmp.eq.s32.totalorder %s22, 0
      %p113 = por %p111, %p112
      %s115 = sadd.s32 %s114, 1
      %p118 = scmp.eq.s32.totalorder %s16, 2
      %p119 = scmp.ne.s32.totalorder %s114, %s116
      %p120 = scmp.eq.s32.totalorder %s16, 0
      %p121 = por %p119, %p120
      %p122 = scmp.ne.s32.totalorder %s114, %s116
      %p123 = scmp.eq.s32.totalorder %s21, 2
      %p124 = por %p122, %p123
      %p125 = scmp.ne.s32.totalorder %s116, %s117
      %p126 = scmp.eq.s32.totalorder %s21, 0
      %p127 = por %p125, %p126
      %p128 = scmp.ne.s32.totalorder %s116, %s117
      %p129 = scmp.eq.s32.totalorder %s22, 2
      %p130 = por %p128, %p129
      %p132 = scmp.ne.s32.totalorder %s117, %s131
      %p133 = scmp.eq.s32.totalorder %s22, 0
      %p134 = por %p132, %p133
      %s135 = ssub.s32 %s23, %s35
      %p136 = scmp.eq.s32.totalorder %s135, 0
      %s138 = sadd.s32 %s137, 1
      %s139 = scalar_select %p136, %s137, %s138
      %p142 = pneg %p136
      %p143 = scmp.eq.s32.totalorder %s16, 2
      %p144 = por %p142, %p143
      %p145 = scmp.ne.s32.totalorder %s137, %s140
      %p146 = scmp.eq.s32.totalorder %s16, 0
      %p147 = por %p145, %p146
      %p148 = scmp.ne.s32.totalorder %s137, %s140
      %p149 = scmp.eq.s32.totalorder %s21, 2
      %p150 = por %p148, %p149
      %p151 = scmp.ne.s32.totalorder %s140, %s141
      %p152 = scmp.eq.s32.totalorder %s21, 0
      %p153 = por %p151, %p152
      %p154 = scmp.ne.s32.totalorder %s140, %s141
      %p155 = scmp.eq.s32.totalorder %s22, 2
      %p156 = por %p154, %p155
      %p158 = scmp.ne.s32.totalorder %s141, %s157
      %p159 = scmp.eq.s32.totalorder %s22, 0
      %p160 = por %p158, %p159
      %p161 = scmp.le.s32.totalorder 1, %s16
      %p162 = scmp.lt.s32.totalorder %s16, 4
      %p163 = pnand %p161, %p162
      %p164 = pneg %p163
      // Predicated region
      $region9: #{tpu_custom_call.1} parent=5 // pred_check
        _
      $region10: #{tpu_custom_call.1} parent=5 // pred_check_branch
        %166 = sbr.rel (%p163) target = $region12
      $region11: #{tpu_custom_call.1} parent=5 // pred_region
        %s167 = ssub.s32 %s16, 1
        // Predicated region
        $region13: #{tpu_custom_call.1} parent=11 // pred_check
          %p168 = pneg %p54
        $region14: #{tpu_custom_call.1} parent=11 // pred_check_branch
          %170 = sbr.rel (%p168) target = $region16
        $region15: #{tpu_custom_call.1} parent=11 // pred_region
          %s172 = ssub.s32 128, 128
          %173 = vsyncadd [#allocation4], %s172
          %s174 = smul.addr %s25, 128
          %s175 = scalar_lea.hbm %s0, %s174
          %s177 = sshll.u32 [#allocation3], 4
          %s178 = int_to_ptr.vmem [resolvable:$true] %s177
          %180 = dma.hbm_to_vmem [thread:$0]  %s175, 128, %s178, [#allocation4]
        $region16: #{tpu_custom_call.1} parent=11 // pred_fallthru
          _
        // Predicated region
        $region17: #{tpu_custom_call.1} parent=11 // pred_check
          %p181 = pneg %p127
        $region18: #{tpu_custom_call.1} parent=11 // pred_check_branch
          %183 = sbr.rel (%p181) target = $region20
        $region19: #{tpu_custom_call.1} parent=11 // pred_region
          %s185 = ssub.s32 16, 16
          %186 = vsyncadd [#allocation6], %s185
          %s188 = sshll.u32 %s3, 4
          %s189 = int_to_ptr.vmem [resolvable:$true] %s188
          %191 = dma.vmem_to_smem %s189, 16, [#allocation9], [#allocation6]
        $region20: #{tpu_custom_call.1} parent=11 // pred_fallthru
          _
      $region12: #{tpu_custom_call.1} parent=5 // pred_fallthru
        _
      %p192 = scmp.lt.s32.totalorder %s16, 3
      // Predicated region
      $region21: #{tpu_custom_call.1} parent=5 // pred_check
        %p193 = pneg %p192
      $region22: #{tpu_custom_call.1} parent=5 // pred_check_branch
        %195 = sbr.rel (%p193) target = $region24
      $region23: #{tpu_custom_call.1} parent=5 // pred_region
        // Predicated region
        $region25: #{tpu_custom_call.1} parent=23 // pred_check
          %p196 = pneg %p74
        $region26: #{tpu_custom_call.1} parent=23 // pred_check_branch
          %198 = sbr.rel (%p196) target = $region28
        $region27: #{tpu_custom_call.1} parent=23 // pred_region
          %s199 = sand.u32 %s64, 1
          %s200 = scalar_lea.sflag [#allocation8], %s199
          %s201 = sand.u32 %s64, 1
          %s202 = smul.addr %s201, 32
          %s203 = scalar_lea.vmem [#allocation7], %s202
          %s205 = ssub.s32 512, 512
          %206 = vsyncadd %s200, %s205
          %s207 = smul.addr %s24, 128
          %s208 = scalar_lea.hbm %s1, %s207
          %s209 = sshll.u32 %s203, 4
          %s210 = int_to_ptr.vmem [resolvable:$true] %s209
          %215 = dma.hbm_to_vmem [thread:$0]  %s208, 512, %s210, %s200, 384, 128, 8
        $region28: #{tpu_custom_call.1} parent=23 // pred_fallthru
          _
        // Predicated region
        $region29: #{tpu_custom_call.1} parent=23 // pred_check
          %p216 = pneg %p100
        $region30: #{tpu_custom_call.1} parent=23 // pred_check_branch
          %218 = sbr.rel (%p216) target = $region32
        $region31: #{tpu_custom_call.1} parent=23 // pred_region
          %p219 = scmp.lt.s32.totalorder %s24, 2
          %s220 = scalar_select %p219, %s24, 2
          %s221 = scalar_lea.vmem %s2, %s220
        $region32: #{tpu_custom_call.1} parent=23 // pred_fallthru
          _
      $region24: #{tpu_custom_call.1} parent=5 // pred_fallthru
        _
      %p222 = scmp.le.s32.totalorder 1, %s16
      %p223 = scmp.lt.s32.totalorder %s16, 4
      %p224 = pnand %p222, %p223
      %p225 = pneg %p224
      // Predicated region
      $region33: #{tpu_custom_call.1} parent=5 // pred_check
        _
      $region34: #{tpu_custom_call.1} parent=5 // pred_check_branch
        %227 = sbr.rel (%p224) target = $region36
      $region35: #{tpu_custom_call.1} parent=5 // pred_region
        %s228 = ssub.s32 %s16, 1
        // Predicated region
        $region37: #{tpu_custom_call.1} parent=35 // pred_check
          %p229 = pneg %p54
        $region38: #{tpu_custom_call.1} parent=35 // pred_check_branch
          %231 = sbr.rel (%p229) target = $region40
        $region39: #{tpu_custom_call.1} parent=35 // pred_region
          %232 = dma.done [#allocation4], 128
        $region40: #{tpu_custom_call.1} parent=35 // pred_fallthru
          _
        %s233 = sand.u32 %s67, 1
        %s234 = scalar_lea.sflag [#allocation8], %s233
        %s235 = sand.u32 %s67, 1
        %s236 = smul.addr %s235, 32
        %s237 = scalar_lea.vmem [#allocation7], %s236
        // Predicated region
        $region41: #{tpu_custom_call.1} parent=35 // pred_check
          %p238 = pneg %p80
        $region42: #{tpu_custom_call.1} parent=35 // pred_check_branch
          %240 = sbr.rel (%p238) target = $region44
        $region43: #{tpu_custom_call.1} parent=35 // pred_region
          %241 = dma.done %s234, 512
        $region44: #{tpu_custom_call.1} parent=35 // pred_fallthru
          _
        // Predicated region
        $region45: #{tpu_custom_call.1} parent=35 // pred_check
          %p242 = pneg %p127
        $region46: #{tpu_custom_call.1} parent=35 // pred_check_branch
          %244 = sbr.rel (%p242) target = $region48
        $region47: #{tpu_custom_call.1} parent=35 // pred_region
          %245 = dma.done [#allocation6], 16
        $region48: #{tpu_custom_call.1} parent=35 // pred_fallthru
          _
        %246 = sfence
        %p247 = pneg %p54
        %p248 = pneg %p51
        %s249 = sand.u32 %s67, 1
        %s250 = scalar_lea.sflag [#allocation8], %s249
        %s251 = sand.u32 %s67, 1
        %s252 = smul.addr %s251, 32
        %s253 = scalar_lea.vmem [#allocation7], %s252
        %p254 = pneg %p80
        %p255 = pneg %p77
        %p256 = scmp.lt.s32.totalorder %s26, 2
        %s257 = scalar_select %p256, %s26, 2
        %s258 = scalar_lea.vmem %s2, %s257
        %p259 = pneg %p106
        %p260 = pneg %p103
        %p261 = pneg %p127
        %p262 = pneg %p124
        %p263 = pneg %p153
        %p264 = pneg %p150
        %p265 = scmp.lt.s32.totalorder %s26, 2
        %s266 = scalar_select %p265, %s26, 2
        %s267 = scalar_lea.vmem %s2, %s266
        %v268 = vld [vmem:[#allocation3] sm:$0xff]
        %v269 = vld [vmem:[%s237] sm:$0xff]
        %v270 = vld [vmem:[%s237 + $0x8] sm:$0xff]
        %v271 = vld [vmem:[%s237 + $0x10] sm:$0xff]
        %v272 = vld [vmem:[%s237 + $0x18] sm:$0xff]
        %v273 = vld [vmem:[%s267] sm:$0x1]
        %v275 = vlaneseq
        %v276 = vshrl.u32 %v275, 7
        %v277 = vsub.s32 0, %v276
        %v278 = vrot.slane %v273, %v277
        %vm280 = vcmask 261120
        %v282 = vsel %vm280, %v268, 0
        %284 = vmatprep.subr.mxu0 0.0
        %285 = vmatpush1.msra.mxu0 %v269
        %286 = vmatprep.subr.mxu0 0.0
        %287 = vmatpush1.msra.mxu0 %v270
        %288 = vmatprep.subr.mxu0 0.0
        %289 = vmatpush1.msra.mxu0 %v271
        %290 = vmatprep.subr.mxu0 0.0
        %291 = vmatpush1.msra.mxu0 %v272
        %292 = vmatprep.subr.mxu0 0.0
        %293 = vmatpush1.msra.mxu0 0.0
        %294 = vmatprep.subr.mxu0 0.0
        %295 = vmatpush1.msra.mxu0 0.0
        %296 = vmatprep.subr.mxu0 0.0
        %297 = vmatpush1.msra.mxu0 0.0
        %298 = vmatprep.subr.mxu0 0.0
        %299 = vmatpush1.msra.mxu0 0.0
        %300 = vmatprep.subr.mxu0 0.0
        %301 = vmatpush1.msra.mxu0 0.0
        %302 = vmatprep.subr.mxu0 0.0
        %303 = vmatpush1.msra.mxu0 0.0
        %304 = vmatprep.subr.mxu0 0.0
        %305 = vmatpush1.msra.mxu0 0.0
        %306 = vmatprep.subr.mxu0 0.0
        %307 = vmatpush1.msra.mxu0 0.0
        %308 = vmatprep.subr.mxu0 0.0
        %309 = vmatpush1.msra.mxu0 0.0
        %310 = vmatprep.subr.mxu0 0.0
        %311 = vmatpush1.msra.mxu0 0.0
        %312 = vmatprep.subr.mxu0 0.0
        %313 = vmatpush1.msra.mxu0 0.0
        %314 = vmatprep.subr.mxu0 0.0
        %315 = vmatpush1.msra.mxu0 0.0
        %316 = vmatprep.subr.mxu0 0.0
        %317 = vmatpush1.msra.mxu0 0.0
        %318 = vmatprep.subr.mxu0 0.0
        %319 = vmatpush1.msra.mxu0 0.0
        %320 = vmatprep.subr.mxu0 0.0
        %321 = vmatpush1.msra.mxu0 0.0
        %322 = vmatprep.subr.mxu0 0.0
        %323 = vmatpush1.msra.mxu0 0.0
        %324 = vmatprep.subr.mxu0 0.0
        %325 = vmatpush1.msra.mxu0 0.0
        %326 = vmatprep.subr.mxu0 0.0
        %327 = vmatpush1.msra.mxu0 0.0
        %328 = vmatprep.subr.mxu0 0.0
        %329 = vmatpush1.msra.mxu0 0.0
        %330 = vmatprep.subr.mxu0 0.0
        %331 = vmatpush1.msra.mxu0 0.0
        %332 = vmatprep.subr.mxu0 0.0
        %333 = vmatpush1.msra.mxu0 0.0
        %334 = vmatprep.subr.mxu0 0.0
        %335 = vmatpush1.msra.mxu0 0.0
        %336 = vmatprep.subr.mxu0 0.0
        %337 = vmatpush1.msra.mxu0 0.0
        %338 = vmatprep.subr.mxu0 0.0
        %339 = vmatpush1.msra.mxu0 0.0
        %340 = vmatprep.subr.mxu0 0.0
        %341 = vmatpush1.msra.mxu0 0.0
        %342 = vmatprep.subr.mxu0 0.0
        %343 = vmatpush1.msra.mxu0 0.0
        %344 = vmatprep.subr.mxu0 0.0
        %345 = vmatpush1.msra.mxu0 0.0
        %346 = vmatprep.subr.mxu0 0.0
        %347 = vmatpush1.msra.mxu0 0.0
        %348 = vmatprep.mubr.f32.mxu0 0.0
        %349 = vmatmul.mubr.f32.gmra.mrb[0].mxu0 %v282
        %v350 = vpop.f32.mrb[0].mxu0
        %v351 = vadd.f32 %v278, %v350
        %v352 = vpop.f32.mrb[0].mxu0
        %353 = vdwg.mxu0
        %354 = vmax.xlane.f32.xlu0 %v351
        %v355 = vpop.xlane.xlu0 %354
        %v356 = vsub.f32 %v351, %v355
        %v357 = vmul.f32 %v356, 1.442695
        %v358 = vpow.pop %v357
        %359 = vadd.xlane.f32.xlu0 %v358
        %v360 = vpop.xlane.xlu0 %359
        %v361 = vrcp.pop %v360
        %v362 = vmul.f32 1.0, %v361
        %s363 = sld [smem:[#allocation9 + %s26]]
        %v364 = vstv %s363
        %v365 = vmul.f32 %v364, %v362
        %v366 = vmul.f32 %v358, %v365
        %p367 = scmp.eq.s32.totalorder %s26, 0
        // Predicated region
        $region49: #{tpu_custom_call.1} parent=35 // pred_check
          %p368 = pneg %p367
        $region50: #{tpu_custom_call.1} parent=35 // pred_check_branch
          %370 = sbr.rel (%p368) target = $region52
        $region51: #{tpu_custom_call.1} parent=35 // pred_region
          %371 = vst [vmem:[#allocation2] sm:$0xff] %v366
        $region52: #{tpu_custom_call.1} parent=35 // pred_fallthru
          _
        %p372 = scmp.ne.s32.totalorder %s26, 0
        // Predicated region
        $region53: #{tpu_custom_call.1} parent=35 // pred_check
          %p373 = pneg %p372
        $region54: #{tpu_custom_call.1} parent=35 // pred_check_branch
          %375 = sbr.rel (%p373) target = $region56
        $region55: #{tpu_custom_call.1} parent=35 // pred_region
          %v376 = vld [vmem:[#allocation2] sm:$0xff]
          %v377 = vadd.f32 %v376, %v366
          %378 = vst [vmem:[#allocation2] sm:$0xff] %v377
        $region56: #{tpu_custom_call.1} parent=35 // pred_fallthru
          _
        %p379 = scmp.eq.s32.totalorder %s26, 2
        // Predicated region
        $region57: #{tpu_custom_call.1} parent=35 // pred_check
          %p380 = pneg %p379
        $region58: #{tpu_custom_call.1} parent=35 // pred_check_branch
          %382 = sbr.rel (%p380) target = $region60
        $region59: #{tpu_custom_call.1} parent=35 // pred_region
          %v383 = vld [vmem:[#allocation2] sm:$0xff]
          %v384 = vlog2.pop %v383
          %v385 = vmul.f32 %v384, 0.6931472
          %386 = vst [vmem:[#allocation10] sm:$0xff] %v385
        $region60: #{tpu_custom_call.1} parent=35 // pred_fallthru
          _
        // Predicated region
        $region61: #{tpu_custom_call.1} parent=35 // pred_check
          %p387 = pneg %p150
        $region62: #{tpu_custom_call.1} parent=35 // pred_check_branch
          %389 = sbr.rel (%p387) target = $region64
        $region63: #{tpu_custom_call.1} parent=35 // pred_region
          %s391 = ssub.s32 128, 128
          %392 = vsyncadd [#allocation5], %s391
          %s393 = smul.addr %s25, 128
          %s394 = scalar_lea.hbm %s4, %s393
          %s396 = sshll.u32 [#allocation10], 4
          %s397 = int_to_ptr.vmem [resolvable:$true] %s396
          %399 = dma.vmem_to_hbm [thread:$0]  %s397, 128, %s394, [#allocation5]
        $region64: #{tpu_custom_call.1} parent=35 // pred_fallthru
          _
        // Predicated region
        $region65: #{tpu_custom_call.1} parent=35 // pred_check
          %p400 = pneg %p150
        $region66: #{tpu_custom_call.1} parent=35 // pred_check_branch
          %402 = sbr.rel (%p400) target = $region68
        $region67: #{tpu_custom_call.1} parent=35 // pred_region
          %403 = dma.done [#allocation5], 128
        $region68: #{tpu_custom_call.1} parent=35 // pred_fallthru
          _
      $region36: #{tpu_custom_call.1} parent=5 // pred_fallthru
        _
      %p404 = scmp.le.s32.totalorder 2, %s16
      // Predicated region
      $region69: #{tpu_custom_call.1} parent=5 // pred_check
        %p405 = pneg %p404
      $region70: #{tpu_custom_call.1} parent=5 // pred_check_branch
        %407 = sbr.rel (%p405) target = $region72
      $region71: #{tpu_custom_call.1} parent=5 // pred_region
        %s408 = ssub.s32 %s16, 2
      $region72: #{tpu_custom_call.1} parent=5 // pred_fallthru
        _
    $region6: #{tpu_custom_call.1} parent=1 // loop_footer
      %s20 = sadd.s32 1, %s16
    $region7: #{tpu_custom_call.1} parent=1 // loop_footer_branch
      %15 = sbr.rel target = $region3
    $region8: #{tpu_custom_call.1} parent=1 // loop_exit
      _
    %409 = vsyncpa [#allocation4], 1
    %s410 = scalar_lea.sflag [#allocation4], 1
    %411 = vsyncpa %s410, 1
    %412 = vsyncpa [#allocation8], 1
    %s413 = scalar_lea.sflag [#allocation8], 1
    %414 = vsyncpa %s413, 1
    %415 = vsyncpa [#allocation5], 1
    %s416 = scalar_lea.sflag [#allocation5], 1
    %417 = vsyncpa %s416, 1
    %418 = vsyncpa [#allocation6], 1
    %s419 = scalar_lea.sflag [#allocation6], 1
    %420 = vsyncpa %s419, 1

</llo_original>
